<compile_context>
chip_gen: v6e
topology: v6e:2x2x1
jax: 0.10.0
libtpu: 0.0.40
codegen_flags: <defaults>
</compile_context>

<pallas_src>
import jax
import jax.numpy as jnp
from jax.experimental import pallas as pl
from jax.experimental.pallas import tpu as pltpu

BERT_SIZE = 768
HIDDEN = 384
NUM_TAGS = 2
OUT_PAD = 128          # lane-dense padded output width (only the first NUM_TAGS cols are real)
NEG_SLOPE = 0.1        # LeakyReLU(0.1)
MAX_TILE_L = 512       # max sequence tile (multiple of 8 sublanes, MXU-friendly)


def _round_up(x, m):
    return ((x + m - 1) // m) * m


def classifier_kernel(x_ref, w1_ref, b1_ref, w2_ref, b2_ref, o_ref):
    # x_ref : (TILE_L, 768)  [bf16 or f32]     w1_ref: (768, 384) [bf16 or f32]
    # b1_ref: (1, 384) f32                     w2_ref: (384, 128) zero-padded past col 2
    # b2_ref: (1, 128) f32                     o_ref : (TILE_L, 128) [bf16 or f32]
    x = x_ref[...]
    h = jnp.dot(x, w1_ref[...], preferred_element_type=jnp.float32) + b1_ref[...]
    h = jnp.maximum(h, NEG_SLOPE * h)                               # LeakyReLU(0.1), slope in (0,1)
    o = jnp.dot(h.astype(w2_ref.dtype), w2_ref[...],
                preferred_element_type=jnp.float32) + b2_ref[...]
    o_ref[...] = o.astype(o_ref.dtype)


def prepare_params(w1, b1, w2, b2, *, use_bf16=True):
    """One-time param prep (hoisted out of the per-call path): pad the 2-wide head to 128
    lanes (lane-dense unmasked stores), reshape biases, cast matmul weights for the MXU."""
    w2p = jnp.zeros((HIDDEN, OUT_PAD), jnp.float32).at[:, :NUM_TAGS].set(
        w2.astype(jnp.float32))
    b2p = jnp.zeros((1, OUT_PAD), jnp.float32).at[0, :NUM_TAGS].set(
        b2.astype(jnp.float32))
    b1r = b1.reshape(1, HIDDEN).astype(jnp.float32)
    if use_bf16:
        w1 = w1.astype(jnp.bfloat16)
        w2p = w2p.astype(jnp.bfloat16)
    else:
        w1 = w1.astype(jnp.float32)
    return w1, b1r, w2p, b2p


def sector_forward(bert_hidden, w1, b1r, w2p, b2p):
    """bert_hidden: (1, L+2, 768) -> (1, L, 2) f32  (== classifier(out_bert[:, 1:-1, :])).
    w1/b1r/w2p/b2p come from prepare_params()."""
    assert bert_hidden.ndim == 3 and bert_hidden.shape[0] == 1
    Lp2 = bert_hidden.shape[1]                        # L + 2 ([CLS]/[SEP] rows included)

    # No HBM->HBM slice of the activations: feed the whole slab, drop 2 rows of the output.
    x2d = bert_hidden.reshape(Lp2, BERT_SIZE).astype(w1.dtype)   # bf16 on the fast path

    # Adaptive tile: big enough to amortize ~0.35us/step, never bigger than the (padded) input.
    tile_l = min(MAX_TILE_L, _round_up(Lp2, 8))
    n_tiles = pl.cdiv(Lp2, tile_l)

    # Megacore only pays off when each TensorCore gets >= 2 tiles; otherwise it just duplicates
    # the constant-index weight DMAs.
    seq_sem = "parallel" if n_tiles >= 4 else "arbitrary"

    out_dtype = x2d.dtype          # bf16 output on the fast path halves write bytes
    itemsize = jnp.dtype(x2d.dtype).itemsize

    cost = pl.CostEstimate(
        flops=2 * Lp2 * BERT_SIZE * HIDDEN + 2 * Lp2 * HIDDEN * OUT_PAD,
        transcendentals=0,
        bytes_accessed=(x2d.size * itemsize
                        + w1.size * jnp.dtype(w1.dtype).itemsize
                        + w2p.size * jnp.dtype(w2p.dtype).itemsize
                        + b1r.size * 4 + b2p.size * 4
                        + Lp2 * OUT_PAD * itemsize),
    )

    out = pl.pallas_call(
        classifier_kernel,
        out_shape=jax.ShapeDtypeStruct((Lp2, OUT_PAD), out_dtype),
        grid=(n_tiles,),
        in_specs=[
            pl.BlockSpec((tile_l, BERT_SIZE), lambda i: (i, 0)),   # activation tiles pipeline
            pl.BlockSpec((BERT_SIZE, HIDDEN), lambda i: (0, 0)),   # weights: constant block,
            pl.BlockSpec((1, HIDDEN), lambda i: (0, 0)),           #   DMA'd once, VMEM-resident
            pl.BlockSpec((HIDDEN, OUT_PAD), lambda i: (0, 0)),
            pl.BlockSpec((1, OUT_PAD), lambda i: (0, 0)),
        ],
        out_specs=pl.BlockSpec((tile_l, OUT_PAD), lambda i: (i, 0)),
        compiler_params=pltpu.CompilerParams(
            dimension_semantics=(seq_sem,),
            vmem_limit_bytes=16 * 1024 * 1024,       # real working set ~8 MiB at TILE_L=512 bf16
        ),
        cost_estimate=cost,
    )(x2d, w1, b1r, w2p, b2p)

    # Drop [CLS]/[SEP] rows, padded lanes (garbage past col 1 / past row Lp2 is never read),
    # and upcast the tiny (L, 2) result back to f32.
    return out[1:Lp2 - 1, :NUM_TAGS].astype(jnp.float32)[None, :, :]


def init_params(key):
    """Deterministic classifier params: nn.Linear(768,384), nn.Linear(384,2)."""
    k1, k2, k3, k4 = jax.random.split(key, 4)
    # Stored transposed to (in, out) for the kernel's x @ W convention.
    w1 = jax.random.normal(k1, (BERT_SIZE, HIDDEN), jnp.float32) * 0.02
    b1 = jax.random.normal(k2, (HIDDEN,), jnp.float32) * 0.02
    w2 = jax.random.normal(k3, (HIDDEN, NUM_TAGS), jnp.float32) * 0.02
    b2 = jax.random.normal(k4, (NUM_TAGS,), jnp.float32) * 0.02
    return w1, b1, w2, b2


def reference_forward(bert_hidden, w1, b1, w2, b2):
    x = bert_hidden[0, 1:-1, :]
    h = x @ w1 + b1
    h = jnp.where(h > 0, h, NEG_SLOPE * h)
    return (h @ w2 + b2)[None, :, :]


if __name__ == "__main__":
    # TODO(synk): tokenizer + pretrained Japanese BERT (and the CRF used only in loss/decode)
    # have no Pallas equivalent; a synthetic last_hidden_state stands in for
    # `self.bert(ids).last_hidden_state`.
    key = jax.random.PRNGKey(0)
    k_x, k_p = jax.random.split(key)

    seq_tokens = 8                                   # len(tokens); BERT adds 2 special tokens
    bert_hidden = jax.random.normal(
        k_x, (1, seq_tokens + 2, BERT_SIZE), jnp.float32)

    w1, b1, w2, b2 = init_params(k_p)
    ref = reference_forward(bert_hidden, w1, b1, w2, b2)

    fwd = jax.jit(sector_forward)

    # --- f32 path: tight-tolerance correctness check -------------------------------------
    p_f32 = prepare_params(w1, b1, w2, b2, use_bf16=False)
    out_f32 = jax.block_until_ready(fwd(bert_hidden, *p_f32))
    assert out_f32.shape == (1, seq_tokens, NUM_TAGS), out_f32.shape
    assert jnp.allclose(out_f32, ref, atol=1e-4, rtol=1e-4), "f32 path mismatch vs reference"

    # --- bf16 fast path (default): MXU-native, f32 accumulation --------------------------
    p_bf16 = prepare_params(w1, b1, w2, b2, use_bf16=True)
    out_bf16 = jax.block_until_ready(fwd(bert_hidden, *p_bf16))
    assert out_bf16.shape == (1, seq_tokens, NUM_TAGS), out_bf16.shape
    assert jnp.allclose(out_bf16, ref, atol=2e-2, rtol=2e-2), "bf16 path mismatch vs reference"

    print("KERNEL_OK")
</pallas_src>

<mosaic_0001>
module attributes {stable_mosaic.version = 11 : i64} {
  func.func @classifier_kernel(%arg0: i32, %arg1: memref<16x768xf32, #tpu.memory_space<vmem>>, %arg2: memref<768x384xf32, #tpu.memory_space<vmem>>, %arg3: memref<1x384xf32, #tpu.memory_space<vmem>>, %arg4: memref<384x128xf32, #tpu.memory_space<vmem>>, %arg5: memref<1x128xf32, #tpu.memory_space<vmem>>, %arg6: memref<16x128xf32, #tpu.memory_space<vmem>>) attributes {dimension_semantics = [#tpu.dimension_semantics<arbitrary>], iteration_bounds = array<i64: 1>, scalar_prefetch = 0 : i64, scratch_operands = 0 : i64, tpu.core_type = #tpu.core_type<tc>, window_params = [{transform_indices = @transform_0, window_bounds = array<i64: 16, 768>}, {pipeline_mode = #tpu.pipeline_mode<synchronous>, transform_indices = @transform_1, window_bounds = array<i64: 768, 384>}, {pipeline_mode = #tpu.pipeline_mode<synchronous>, transform_indices = @transform_2, window_bounds = array<i64: 1, 384>}, {pipeline_mode = #tpu.pipeline_mode<synchronous>, transform_indices = @transform_3, window_bounds = array<i64: 384, 128>}, {pipeline_mode = #tpu.pipeline_mode<synchronous>, transform_indices = @transform_4, window_bounds = array<i64: 1, 128>}, {transform_indices = @transform_5, window_bounds = array<i64: 16, 128>}]} {
    %c0 = arith.constant 0 : index
    %c0_0 = arith.constant 0 : index
    %0 = vector.load %arg1[%c0, %c0_0] : memref<16x768xf32, #tpu.memory_space<vmem>>, vector<16x768xf32>
    %c0_1 = arith.constant 0 : index
    %c0_2 = arith.constant 0 : index
    %1 = vector.load %arg2[%c0_1, %c0_2] : memref<768x384xf32, #tpu.memory_space<vmem>>, vector<768x384xf32>
    %cst = arith.constant dense<0.000000e+00> : vector<16x384xf32>
    %2 = tpu.matmul %0, %1, %cst {dimension_numbers = #tpu.dot_dimension_numbers<[1], [0], [0], [1], [0, 0, 1, 1], [], []>} : vector<16x768xf32>, vector<768x384xf32>, vector<16x384xf32> -> vector<16x384xf32>
    %c0_3 = arith.constant 0 : index
    %c0_4 = arith.constant 0 : index
    %3 = vector.load %arg3[%c0_3, %c0_4] : memref<1x384xf32, #tpu.memory_space<vmem>>, vector<1x384xf32>
    %4 = vector.broadcast %3 : vector<1x384xf32> to vector<16x384xf32>
    %5 = arith.addf %2, %4 : vector<16x384xf32>
    %cst_5 = arith.constant 1.000000e-01 : f32
    %6 = vector.broadcast %cst_5 : f32 to vector<16x384xf32>
    %7 = arith.mulf %6, %5 : vector<16x384xf32>
    %8 = arith.maximumf %5, %7 : vector<16x384xf32>
    %c0_6 = arith.constant 0 : index
    %c0_7 = arith.constant 0 : index
    %9 = vector.load %arg4[%c0_6, %c0_7] : memref<384x128xf32, #tpu.memory_space<vmem>>, vector<384x128xf32>
    %cst_8 = arith.constant dense<0.000000e+00> : vector<16x128xf32>
    %10 = tpu.matmul %8, %9, %cst_8 {dimension_numbers = #tpu.dot_dimension_numbers<[1], [0], [0], [1], [0, 0, 1, 1], [], []>} : vector<16x384xf32>, vector<384x128xf32>, vector<16x128xf32> -> vector<16x128xf32>
    %c0_9 = arith.constant 0 : index
    %c0_10 = arith.constant 0 : index
    %11 = vector.load %arg5[%c0_9, %c0_10] : memref<1x128xf32, #tpu.memory_space<vmem>>, vector<1x128xf32>
    %12 = vector.broadcast %11 : vector<1x128xf32> to vector<16x128xf32>
    %13 = arith.addf %10, %12 : vector<16x128xf32>
    %c0_11 = arith.constant 0 : index
    %c0_12 = arith.constant 0 : index
    %14 = vector.load %arg6[%c0_11, %c0_12] : memref<16x128xf32, #tpu.memory_space<vmem>>, vector<16x128xf32>
    tpu.vector_store %arg6[%c0_11, %c0_12], %13 {strides = array<i32>} : memref<16x128xf32, #tpu.memory_space<vmem>>, vector<16x128xf32>,
    return
  }
  func.func @transform_0(%arg0: i32) -> (i32, i32) {
    %c0_i32 = arith.constant 0 : i32
    %c0_i32_0 = arith.constant 0 : i32
    return %arg0, %c0_i32 : i32, i32
  }
  func.func @transform_1(%arg0: i32) -> (i32, i32) {
    %c0_i32 = arith.constant 0 : i32
    %c0_i32_0 = arith.constant 0 : i32
    %c0_i32_1 = arith.constant 0 : i32
    return %c0_i32, %c0_i32_0 : i32, i32
  }
  func.func @transform_2(%arg0: i32) -> (i32, i32) {
    %c0_i32 = arith.constant 0 : i32
    %c0_i32_0 = arith.constant 0 : i32
    %c0_i32_1 = arith.constant 0 : i32
    return %c0_i32, %c0_i32_0 : i32, i32
  }
  func.func @transform_3(%arg0: i32) -> (i32, i32) {
    %c0_i32 = arith.constant 0 : i32
    %c0_i32_0 = arith.constant 0 : i32
    %c0_i32_1 = arith.constant 0 : i32
    return %c0_i32, %c0_i32_0 : i32, i32
  }
  func.func @transform_4(%arg0: i32) -> (i32, i32) {
    %c0_i32 = arith.constant 0 : i32
    %c0_i32_0 = arith.constant 0 : i32
    %c0_i32_1 = arith.constant 0 : i32
    return %c0_i32, %c0_i32_0 : i32, i32
  }
  func.func @transform_5(%arg0: i32) -> (i32, i32) {
    %c0_i32 = arith.constant 0 : i32
    %c0_i32_0 = arith.constant 0 : i32
    return %arg0, %c0_i32 : i32, i32
  }
}

</mosaic_0001>

<llo_original>
// kernel: sector_forward.1
$region0: #{sector_forward.1}
  #allocation0 [shape = 'u32[]', space=smem, size = 0x4, offset = 0x4, fixed_abs, tag = 'smem constant byte address 0x4 - core index']
  #allocation1 [shape = 'u32[144,128]{1,0:T(1,128)}', space=vmem, size = 0x12000, scoped, tag = 'internal scratch']
  %s0 = inlined_call_operand.vmem [shape: f32[10,768], index: 0, kind: input, shape index: {}]
  %s1 = inlined_call_operand.hbm [shape: f32[768,384], index: 1, kind: input, shape index: {}]
  %s2 = inlined_call_operand.hbm [shape: f32[1,384], index: 2, kind: input, shape index: {}]
  %s3 = inlined_call_operand.hbm [shape: f32[384,128], index: 3, kind: input, shape index: {}]
  %s4 = inlined_call_operand.hbm [shape: f32[1,128], index: 4, kind: input, shape index: {}]
  %s5 = inlined_call_operand.vmem [shape: f32[10,128], index: 5, kind: output, shape index: {}]
  %s6 = sld [smem:[#allocation0]]
  $region46: #{sector_forward.1} parent=0
    _
  %s8 = ssub.s32 1, %s6
  %s9 = scalar_select 0, %s8, %s6
  $region1: #{sector_forward.1} parent=0
    #allocation2 [shape = 'u8[1179648]{0}', space=vmem, size = 0x120000, scoped, tag = 'input window, operand 1, single buffered']
    #allocation3 [shape = 's32[1]{0}', space=sflag, size = 0x4, scoped, tag = 'scoped memory for sector_forward.1']
    #allocation4 [shape = 'u8[1536]{0}', space=vmem, size = 0x800, scoped, tag = 'input window, operand 2, single buffered']
    #allocation5 [shape = 's32[1]{0}', space=sflag, size = 0x4, scoped, tag = 'scoped memory for sector_forward.1']
    #allocation6 [shape = 'u8[196608]{0}', space=vmem, size = 0x30000, scoped, tag = 'input window, operand 3, single buffered']
    #allocation7 [shape = 'u8[512]{0}', space=vmem, size = 0x400, scoped, tag = 'input window, operand 4, single buffered']
    #allocation8 [shape = 's32[1]{0}', space=sflag, size = 0x4, scoped, tag = 'scoped memory for sector_forward.1']
    %10 = vsyncpa [#allocation3], 0
    %11 = vsyncpa [#allocation5], 0
    %12 = vsyncpa [#allocation8], 0
    // Predicated region
    $region2: #{sector_forward.1} parent=1 // pred_check
      _
    $region3: #{sector_forward.1} parent=1 // pred_check_branch
      %14 = sbr.rel (0) target = $region5
    $region4: #{sector_forward.1} parent=1 // pred_region
      _
    $region5: #{sector_forward.1} parent=1 // pred_fallthru
      _
    // Predicated region
    $region6: #{sector_forward.1} parent=1 // pred_check
      _
    $region7: #{sector_forward.1} parent=1 // pred_check_branch
      %16 = sbr.rel (0) target = $region9
    $region8: #{sector_forward.1} parent=1 // pred_region
      %s18 = ssub.s32 36864, 36864
      %19 = vsyncadd [#allocation3], %s18
      %s20 = sshll.u32 [#allocation2], 4
      %s21 = int_to_ptr.vmem [resolvable:$true] %s20
      %26 = dma.hbm_to_vmem [thread:$0]  %s1, 36864, %s21, [#allocation3], 384, 384, 24
    $region9: #{sector_forward.1} parent=1 // pred_fallthru
      _
    // Predicated region
    $region10: #{sector_forward.1} parent=1 // pred_check
      _
    $region11: #{sector_forward.1} parent=1 // pred_check_branch
      %28 = sbr.rel (0) target = $region13
    $region12: #{sector_forward.1} parent=1 // pred_region
      %s30 = ssub.s32 48, 48
      %31 = vsyncadd [#allocation5], %s30
      %s33 = sshll.u32 [#allocation4], 4
      %s34 = int_to_ptr.vmem [resolvable:$true] %s33
      %36 = dma.hbm_to_vmem [thread:$0]  %s2, 48, %s34, [#allocation5]
    $region13: #{sector_forward.1} parent=1 // pred_fallthru
      _
    // Predicated region
    $region14: #{sector_forward.1} parent=1 // pred_check
      _
    $region15: #{sector_forward.1} parent=1 // pred_check_branch
      %38 = sbr.rel (0) target = $region17
    $region16: #{sector_forward.1} parent=1 // pred_region
      %s40 = ssub.s32 6144, 6144
      %41 = vsyncadd [#allocation5], %s40
      %s42 = sshll.u32 [#allocation6], 4
      %s43 = int_to_ptr.vmem [resolvable:$true] %s42
      %48 = dma.hbm_to_vmem [thread:$0]  %s3, 6144, %s43, [#allocation5], 128, 128, 8
    $region17: #{sector_forward.1} parent=1 // pred_fallthru
      _
    // Predicated region
    $region18: #{sector_forward.1} parent=1 // pred_check
      _
    $region19: #{sector_forward.1} parent=1 // pred_check_branch
      %50 = sbr.rel (0) target = $region21
    $region20: #{sector_forward.1} parent=1 // pred_region
      %s52 = ssub.s32 16, 16
      %53 = vsyncadd [#allocation8], %s52
      %s55 = sshll.u32 [#allocation7], 4
      %s56 = int_to_ptr.vmem [resolvable:$true] %s55
      %58 = dma.hbm_to_vmem [thread:$0]  %s4, 16, %s56, [#allocation8]
    $region21: #{sector_forward.1} parent=1 // pred_fallthru
      _
    // Predicated region
    $region22: #{sector_forward.1} parent=1 // pred_check
      _
    $region23: #{sector_forward.1} parent=1 // pred_check_branch
      %60 = sbr.rel (0) target = $region25
    $region24: #{sector_forward.1} parent=1 // pred_region
      %61 = dma.done [#allocation3], 36864
    $region25: #{sector_forward.1} parent=1 // pred_fallthru
      _
    // Predicated region
    $region26: #{sector_forward.1} parent=1 // pred_check
      _
    $region27: #{sector_forward.1} parent=1 // pred_check_branch
      %63 = sbr.rel (0) target = $region29
    $region28: #{sector_forward.1} parent=1 // pred_region
      %64 = dma.done [#allocation5], 48
    $region29: #{sector_forward.1} parent=1 // pred_fallthru
      _
    // Predicated region
    $region30: #{sector_forward.1} parent=1 // pred_check
      _
    $region31: #{sector_forward.1} parent=1 // pred_check_branch
      %66 = sbr.rel (0) target = $region33
    $region32: #{sector_forward.1} parent=1 // pred_region
      %67 = dma.done [#allocation5], 6144
    $region33: #{sector_forward.1} parent=1 // pred_fallthru
      _
    // Predicated region
    $region34: #{sector_forward.1} parent=1 // pred_check
      _
    $region35: #{sector_forward.1} parent=1 // pred_check_branch
      %69 = sbr.rel (0) target = $region37
    $region36: #{sector_forward.1} parent=1 // pred_region
      %70 = dma.done [#allocation8], 16
    $region37: #{sector_forward.1} parent=1 // pred_fallthru
      _
    %v71 = vld [vmem:[%s0] sm:$0xff]
    %v72 = vld [vmem:[%s0 + $0x8] sm:$0xff]
    %v73 = vld [vmem:[%s0 + $0x10] sm:$0xff]
    %v74 = vld [vmem:[%s0 + $0x18] sm:$0xff]
    %v75 = vld [vmem:[%s0 + $0x20] sm:$0xff]
    %v76 = vld [vmem:[%s0 + $0x28] sm:$0xff]
    %v77 = vld [vmem:[%s0 + $0x30] sm:$0xff]
    %v78 = vld [vmem:[%s0 + $0x38] sm:$0xff]
    %v79 = vld [vmem:[%s0 + $0x40] sm:$0xff]
    %v80 = vld [vmem:[%s0 + $0x48] sm:$0xff]
    %v81 = vld [vmem:[%s0 + $0x50] sm:$0xff]
    %v82 = vld [vmem:[%s0 + $0x58] sm:$0xff]
    %v83 = vld [vmem:[#allocation2] sm:$0xff]
    %v84 = vld [vmem:[#allocation2 + $0x8] sm:$0xff]
    %v85 = vld [vmem:[#allocation2 + $0x10] sm:$0xff]
    %v86 = vld [vmem:[#allocation2 + $0x18] sm:$0xff]
    %v87 = vld [vmem:[#allocation2 + $0x20] sm:$0xff]
    %v88 = vld [vmem:[#allocation2 + $0x28] sm:$0xff]
    %v89 = vld [vmem:[#allocation2 + $0x30] sm:$0xff]
    %v90 = vld [vmem:[#allocation2 + $0x38] sm:$0xff]
    %v91 = vld [vmem:[#allocation2 + $0x40] sm:$0xff]
    %v92 = vld [vmem:[#allocation2 + $0x48] sm:$0xff]
    %v93 = vld [vmem:[#allocation2 + $0x50] sm:$0xff]
    %v94 = vld [vmem:[#allocation2 + $0x58] sm:$0xff]
    %v95 = vld [vmem:[#allocation2 + $0x60] sm:$0xff]
    %v96 = vld [vmem:[#allocation2 + $0x68] sm:$0xff]
    %v97 = vld [vmem:[#allocation2 + $0x70] sm:$0xff]
    %v98 = vld [vmem:[#allocation2 + $0x78] sm:$0xff]
    %v99 = vld [vmem:[#allocation2 + $0x80] sm:$0xff]
    %v100 = vld [vmem:[#allocation2 + $0x88] sm:$0xff]
    %v101 = vld [vmem:[#allocation2 + $0x90] sm:$0xff]
    %v102 = vld [vmem:[#allocation2 + $0x98] sm:$0xff]
    %v103 = vld [vmem:[#allocation2 + $0xa0] sm:$0xff]
    %v104 = vld [vmem:[#allocation2 + $0xa8] sm:$0xff]
    %v105 = vld [vmem:[#allocation2 + $0xb0] sm:$0xff]
    %v106 = vld [vmem:[#allocation2 + $0xb8] sm:$0xff]
    %v107 = vld [vmem:[#allocation2 + $0xc0] sm:$0xff]
    %v108 = vld [vmem:[#allocation2 + $0xc8] sm:$0xff]
    %v109 = vld [vmem:[#allocation2 + $0xd0] sm:$0xff]
    %v110 = vld [vmem:[#allocation2 + $0xd8] sm:$0xff]
    %v111 = vld [vmem:[#allocation2 + $0xe0] sm:$0xff]
    %v112 = vld [vmem:[#allocation2 + $0xe8] sm:$0xff]
    %v113 = vld [vmem:[#allocation2 + $0xf0] sm:$0xff]
    %v114 = vld [vmem:[#allocation2 + $0xf8] sm:$0xff]
    %v115 = vld [vmem:[#allocation2 + $0x100] sm:$0xff]
    %v116 = vld [vmem:[#allocation2 + $0x108] sm:$0xff]
    %v117 = vld [vmem:[#allocation2 + $0x110] sm:$0xff]
    %v118 = vld [vmem:[#allocation2 + $0x118] sm:$0xff]
    %v119 = vld [vmem:[#allocation2 + $0x120] sm:$0xff]
    %v120 = vld [vmem:[#allocation2 + $0x128] sm:$0xff]
    %v121 = vld [vmem:[#allocation2 + $0x130] sm:$0xff]
    %v122 = vld [vmem:[#allocation2 + $0x138] sm:$0xff]
    %v123 = vld [vmem:[#allocation2 + $0x140] sm:$0xff]
    %v124 = vld [vmem:[#allocation2 + $0x148] sm:$0xff]
    %v125 = vld [vmem:[#allocation2 + $0x150] sm:$0xff]
    %v126 = vld [vmem:[#allocation2 + $0x158] sm:$0xff]
    %v127 = vld [vmem:[#allocation2 + $0x160] sm:$0xff]
    %v128 = vld [vmem:[#allocation2 + $0x168] sm:$0xff]
    %v129 = vld [vmem:[#allocation2 + $0x170] sm:$0xff]
    %v130 = vld [vmem:[#allocation2 + $0x178] sm:$0xff]
    %v131 = vld [vmem:[#allocation2 + $0x180] sm:$0xff]
    %v132 = vld [vmem:[#allocation2 + $0x188] sm:$0xff]
    %v133 = vld [vmem:[#allocation2 + $0x190] sm:$0xff]
    %v134 = vld [vmem:[#allocation2 + $0x198] sm:$0xff]
    %v135 = vld [vmem:[#allocation2 + $0x1a0] sm:$0xff]
    %v136 = vld [vmem:[#allocation2 + $0x1a8] sm:$0xff]
    %v137 = vld [vmem:[#allocation2 + $0x1b0] sm:$0xff]
    %v138 = vld [vmem:[#allocation2 + $0x1b8] sm:$0xff]
    %v139 = vld [vmem:[#allocation2 + $0x1c0] sm:$0xff]
    %v140 = vld [vmem:[#allocation2 + $0x1c8] sm:$0xff]
    %v141 = vld [vmem:[#allocation2 + $0x1d0] sm:$0xff]
    %v142 = vld [vmem:[#allocation2 + $0x1d8] sm:$0xff]
    %v143 = vld [vmem:[#allocation2 + $0x1e0] sm:$0xff]
    %v144 = vld [vmem:[#allocation2 + $0x1e8] sm:$0xff]
    %v145 = vld [vmem:[#allocation2 + $0x1f0] sm:$0xff]
    %v146 = vld [vmem:[#allocation2 + $0x1f8] sm:$0xff]
    %v147 = vld [vmem:[#allocation2 + $0x200] sm:$0xff]
    %v148 = vld [vmem:[#allocation2 + $0x208] sm:$0xff]
    %v149 = vld [vmem:[#allocation2 + $0x210] sm:$0xff]
    %v150 = vld [vmem:[#allocation2 + $0x218] sm:$0xff]
    %v151 = vld [vmem:[#allocation2 + $0x220] sm:$0xff]
    %v152 = vld [vmem:[#allocation2 + $0x228] sm:$0xff]
    %v153 = vld [vmem:[#allocation2 + $0x230] sm:$0xff]
    %v154 = vld [vmem:[#allocation2 + $0x238] sm:$0xff]
    %v155 = vld [vmem:[#allocation2 + $0x240] sm:$0xff]
    %v156 = vld [vmem:[#allocation2 + $0x248] sm:$0xff]
    %v157 = vld [vmem:[#allocation2 + $0x250] sm:$0xff]
    %v158 = vld [vmem:[#allocation2 + $0x258] sm:$0xff]
    %v159 = vld [vmem:[#allocation2 + $0x260] sm:$0xff]
    %v160 = vld [vmem:[#allocation2 + $0x268] sm:$0xff]
    %v161 = vld [vmem:[#allocation2 + $0x270] sm:$0xff]
    %v162 = vld [vmem:[#allocation2 + $0x278] sm:$0xff]
    %v163 = vld [vmem:[#allocation2 + $0x280] sm:$0xff]
    %v164 = vld [vmem:[#allocation2 + $0x288] sm:$0xff]
    %v165 = vld [vmem:[#allocation2 + $0x290] sm:$0xff]
    %v166 = vld [vmem:[#allocation2 + $0x298] sm:$0xff]
    %v167 = vld [vmem:[#allocation2 + $0x2a0] sm:$0xff]
    %v168 = vld [vmem:[#allocation2 + $0x2a8] sm:$0xff]
    %v169 = vld [vmem:[#allocation2 + $0x2b0] sm:$0xff]
    %v170 = vld [vmem:[#allocation2 + $0x2b8] sm:$0xff]
    %v171 = vld [vmem:[#allocation2 + $0x2c0] sm:$0xff]
    %v172 = vld [vmem:[#allocation2 + $0x2c8] sm:$0xff]
    %v173 = vld [vmem:[#allocation2 + $0x2d0] sm:$0xff]
    %v174 = vld [vmem:[#allocation2 + $0x2d8] sm:$0xff]
    %v175 = vld [vmem:[#allocation2 + $0x2e0] sm:$0xff]
    %v176 = vld [vmem:[#allocation2 + $0x2e8] sm:$0xff]
    %v177 = vld [vmem:[#allocation2 + $0x2f0] sm:$0xff]
    %v178 = vld [vmem:[#allocation2 + $0x2f8] sm:$0xff]
    %v179 = vld [vmem:[#allocation2 + $0x300] sm:$0xff]
    %v180 = vld [vmem:[#allocation2 + $0x308] sm:$0xff]
    %v181 = vld [vmem:[#allocation2 + $0x310] sm:$0xff]
    %v182 = vld [vmem:[#allocation2 + $0x318] sm:$0xff]
    %v183 = vld [vmem:[#allocation2 + $0x320] sm:$0xff]
    %v184 = vld [vmem:[#allocation2 + $0x328] sm:$0xff]
    %v185 = vld [vmem:[#allocation2 + $0x330] sm:$0xff]
    %v186 = vld [vmem:[#allocation2 + $0x338] sm:$0xff]
    %v187 = vld [vmem:[#allocation2 + $0x340] sm:$0xff]
    %v188 = vld [vmem:[#allocation2 + $0x348] sm:$0xff]
    %v189 = vld [vmem:[#allocation2 + $0x350] sm:$0xff]
    %v190 = vld [vmem:[#allocation2 + $0x358] sm:$0xff]
    %v191 = vld [vmem:[#allocation2 + $0x360] sm:$0xff]
    %v192 = vld [vmem:[#allocation2 + $0x368] sm:$0xff]
    %v193 = vld [vmem:[#allocation2 + $0x370] sm:$0xff]
    %v194 = vld [vmem:[#allocation2 + $0x378] sm:$0xff]
    %v195 = vld [vmem:[#allocation2 + $0x380] sm:$0xff]
    %v196 = vld [vmem:[#allocation2 + $0x388] sm:$0xff]
    %v197 = vld [vmem:[#allocation2 + $0x390] sm:$0xff]
    %v198 = vld [vmem:[#allocation2 + $0x398] sm:$0xff]
    %v199 = vld [vmem:[#allocation2 + $0x3a0] sm:$0xff]
    %v200 = vld [vmem:[#allocation2 + $0x3a8] sm:$0xff]
    %v201 = vld [vmem:[#allocation2 + $0x3b0] sm:$0xff]
    %v202 = vld [vmem:[#allocation2 + $0x3b8] sm:$0xff]
    %v203 = vld [vmem:[#allocation2 + $0x3c0] sm:$0xff]
    %v204 = vld [vmem:[#allocation2 + $0x3c8] sm:$0xff]
    %v205 = vld [vmem:[#allocation2 + $0x3d0] sm:$0xff]
    %v206 = vld [vmem:[#allocation2 + $0x3d8] sm:$0xff]
    %v207 = vld [vmem:[#allocation2 + $0x3e0] sm:$0xff]
    %v208 = vld [vmem:[#allocation2 + $0x3e8] sm:$0xff]
    %v209 = vld [vmem:[#allocation2 + $0x3f0] sm:$0xff]
    %v210 = vld [vmem:[#allocation2 + $0x3f8] sm:$0xff]
    %v211 = vld [vmem:[#allocation2 + $0x400] sm:$0xff]
    %v212 = vld [vmem:[#allocation2 + $0x408] sm:$0xff]
    %v213 = vld [vmem:[#allocation2 + $0x410] sm:$0xff]
    %v214 = vld [vmem:[#allocation2 + $0x418] sm:$0xff]
    %v215 = vld [vmem:[#allocation2 + $0x420] sm:$0xff]
    %v216 = vld [vmem:[#allocation2 + $0x428] sm:$0xff]
    %v217 = vld [vmem:[#allocation2 + $0x430] sm:$0xff]
    %v218 = vld [vmem:[#allocation2 + $0x438] sm:$0xff]
    %v219 = vld [vmem:[#allocation2 + $0x440] sm:$0xff]
    %v220 = vld [vmem:[#allocation2 + $0x448] sm:$0xff]
    %v221 = vld [vmem:[#allocation2 + $0x450] sm:$0xff]
    %v222 = vld [vmem:[#allocation2 + $0x458] sm:$0xff]
    %v223 = vld [vmem:[#allocation2 + $0x460] sm:$0xff]
    %v224 = vld [vmem:[#allocation2 + $0x468] sm:$0xff]
    %v225 = vld [vmem:[#allocation2 + $0x470] sm:$0xff]
    %v226 = vld [vmem:[#allocation2 + $0x478] sm:$0xff]
    %v227 = vld [vmem:[#allocation2 + $0x480] sm:$0xff]
    %v228 = vld [vmem:[#allocation2 + $0x488] sm:$0xff]
    %v229 = vld [vmem:[#allocation2 + $0x490] sm:$0xff]
    %v230 = vld [vmem:[#allocation2 + $0x498] sm:$0xff]
    %v231 = vld [vmem:[#allocation2 + $0x4a0] sm:$0xff]
    %v232 = vld [vmem:[#allocation2 + $0x4a8] sm:$0xff]
    %v233 = vld [vmem:[#allocation2 + $0x4b0] sm:$0xff]
    %v234 = vld [vmem:[#allocation2 + $0x4b8] sm:$0xff]
    %v235 = vld [vmem:[#allocation2 + $0x4c0] sm:$0xff]
    %v236 = vld [vmem:[#allocation2 + $0x4c8] sm:$0xff]
    %v237 = vld [vmem:[#allocation2 + $0x4d0] sm:$0xff]
    %v238 = vld [vmem:[#allocation2 + $0x4d8] sm:$0xff]
    %v239 = vld [vmem:[#allocation2 + $0x4e0] sm:$0xff]
    %v240 = vld [vmem:[#allocation2 + $0x4e8] sm:$0xff]
    %v241 = vld [vmem:[#allocation2 + $0x4f0] sm:$0xff]
    %v242 = vld [vmem:[#allocation2 + $0x4f8] sm:$0xff]
    %v243 = vld [vmem:[#allocation2 + $0x500] sm:$0xff]
    %v244 = vld [vmem:[#allocation2 + $0x508] sm:$0xff]
    %v245 = vld [vmem:[#allocation2 + $0x510] sm:$0xff]
    %v246 = vld [vmem:[#allocation2 + $0x518] sm:$0xff]
    %v247 = vld [vmem:[#allocation2 + $0x520] sm:$0xff]
    %v248 = vld [vmem:[#allocation2 + $0x528] sm:$0xff]
    %v249 = vld [vmem:[#allocation2 + $0x530] sm:$0xff]
    %v250 = vld [vmem:[#allocation2 + $0x538] sm:$0xff]
    %v251 = vld [vmem:[#allocation2 + $0x540] sm:$0xff]
    %v252 = vld [vmem:[#allocation2 + $0x548] sm:$0xff]
    %v253 = vld [vmem:[#allocation2 + $0x550] sm:$0xff]
    %v254 = vld [vmem:[#allocation2 + $0x558] sm:$0xff]
    %v255 = vld [vmem:[#allocation2 + $0x560] sm:$0xff]
    %v256 = vld [vmem:[#allocation2 + $0x568] sm:$0xff]
    %v257 = vld [vmem:[#allocation2 + $0x570] sm:$0xff]
    %v258 = vld [vmem:[#allocation2 + $0x578] sm:$0xff]
    %v259 = vld [vmem:[#allocation2 + $0x580] sm:$0xff]
    %v260 = vld [vmem:[#allocation2 + $0x588] sm:$0xff]
    %v261 = vld [vmem:[#allocation2 + $0x590] sm:$0xff]
    %v262 = vld [vmem:[#allocation2 + $0x598] sm:$0xff]
    %v263 = vld [vmem:[#allocation2 + $0x5a0] sm:$0xff]
    %v264 = vld [vmem:[#allocation2 + $0x5a8] sm:$0xff]
    %v265 = vld [vmem:[#allocation2 + $0x5b0] sm:$0xff]
    %v266 = vld [vmem:[#allocation2 + $0x5b8] sm:$0xff]
    %v267 = vld [vmem:[#allocation2 + $0x5c0] sm:$0xff]
    %v268 = vld [vmem:[#allocation2 + $0x5c8] sm:$0xff]
    %v269 = vld [vmem:[#allocation2 + $0x5d0] sm:$0xff]
    %v270 = vld [vmem:[#allocation2 + $0x5d8] sm:$0xff]
    %v271 = vld [vmem:[#allocation2 + $0x5e0] sm:$0xff]
    %v272 = vld [vmem:[#allocation2 + $0x5e8] sm:$0xff]
    %v273 = vld [vmem:[#allocation2 + $0x5f0] sm:$0xff]
    %v274 = vld [vmem:[#allocation2 + $0x5f8] sm:$0xff]
    %v275 = vld [vmem:[#allocation2 + $0x600] sm:$0xff]
    %v276 = vld [vmem:[#allocation2 + $0x608] sm:$0xff]
    %v277 = vld [vmem:[#allocation2 + $0x610] sm:$0xff]
    %v278 = vld [vmem:[#allocation2 + $0x618] sm:$0xff]
    %v279 = vld [vmem:[#allocation2 + $0x620] sm:$0xff]
    %v280 = vld [vmem:[#allocation2 + $0x628] sm:$0xff]
    %v281 = vld [vmem:[#allocation2 + $0x630] sm:$0xff]
    %v282 = vld [vmem:[#allocation2 + $0x638] sm:$0xff]
    %v283 = vld [vmem:[#allocation2 + $0x640] sm:$0xff]
    %v284 = vld [vmem:[#allocation2 + $0x648] sm:$0xff]
    %v285 = vld [vmem:[#allocation2 + $0x650] sm:$0xff]
    %v286 = vld [vmem:[#allocation2 + $0x658] sm:$0xff]
    %v287 = vld [vmem:[#allocation2 + $0x660] sm:$0xff]
    %v288 = vld [vmem:[#allocation2 + $0x668] sm:$0xff]
    %v289 = vld [vmem:[#allocation2 + $0x670] sm:$0xff]
    %v290 = vld [vmem:[#allocation2 + $0x678] sm:$0xff]
    %v291 = vld [vmem:[#allocation2 + $0x680] sm:$0xff]
    %v292 = vld [vmem:[#allocation2 + $0x688] sm:$0xff]
    %v293 = vld [vmem:[#allocation2 + $0x690] sm:$0xff]
    %v294 = vld [vmem:[#allocation2 + $0x698] sm:$0xff]
    %v295 = vld [vmem:[#allocation2 + $0x6a0] sm:$0xff]
    %v296 = vld [vmem:[#allocation2 + $0x6a8] sm:$0xff]
    %v297 = vld [vmem:[#allocation2 + $0x6b0] sm:$0xff]
    %v298 = vld [vmem:[#allocation2 + $0x6b8] sm:$0xff]
    %v299 = vld [vmem:[#allocation2 + $0x6c0] sm:$0xff]
    %v300 = vld [vmem:[#allocation2 + $0x6c8] sm:$0xff]
    %v301 = vld [vmem:[#allocation2 + $0x6d0] sm:$0xff]
    %v302 = vld [vmem:[#allocation2 + $0x6d8] sm:$0xff]
    %v303 = vld [vmem:[#allocation2 + $0x6e0] sm:$0xff]
    %v304 = vld [vmem:[#allocation2 + $0x6e8] sm:$0xff]
    %v305 = vld [vmem:[#allocation2 + $0x6f0] sm:$0xff]
    %v306 = vld [vmem:[#allocation2 + $0x6f8] sm:$0xff]
    %v307 = vld [vmem:[#allocation2 + $0x700] sm:$0xff]
    %v308 = vld [vmem:[#allocation2 + $0x708] sm:$0xff]
    %v309 = vld [vmem:[#allocation2 + $0x710] sm:$0xff]
    %v310 = vld [vmem:[#allocation2 + $0x718] sm:$0xff]
    %v311 = vld [vmem:[#allocation2 + $0x720] sm:$0xff]
    %v312 = vld [vmem:[#allocation2 + $0x728] sm:$0xff]
    %v313 = vld [vmem:[#allocation2 + $0x730] sm:$0xff]
    %v314 = vld [vmem:[#allocation2 + $0x738] sm:$0xff]
    %v315 = vld [vmem:[#allocation2 + $0x740] sm:$0xff]
    %v316 = vld [vmem:[#allocation2 + $0x748] sm:$0xff]
    %v317 = vld [vmem:[#allocation2 + $0x750] sm:$0xff]
    %v318 = vld [vmem:[#allocation2 + $0x758] sm:$0xff]
    %v319 = vld [vmem:[#allocation2 + $0x760] sm:$0xff]
    %v320 = vld [vmem:[#allocation2 + $0x768] sm:$0xff]
    %v321 = vld [vmem:[#allocation2 + $0x770] sm:$0xff]
    %v322 = vld [vmem:[#allocation2 + $0x778] sm:$0xff]
    %v323 = vld [vmem:[#allocation2 + $0x780] sm:$0xff]
    %v324 = vld [vmem:[#allocation2 + $0x788] sm:$0xff]
    %v325 = vld [vmem:[#allocation2 + $0x790] sm:$0xff]
    %v326 = vld [vmem:[#allocation2 + $0x798] sm:$0xff]
    %v327 = vld [vmem:[#allocation2 + $0x7a0] sm:$0xff]
    %v328 = vld [vmem:[#allocation2 + $0x7a8] sm:$0xff]
    %v329 = vld [vmem:[#allocation2 + $0x7b0] sm:$0xff]
    %v330 = vld [vmem:[#allocation2 + $0x7b8] sm:$0xff]
    %v331 = vld [vmem:[#allocation2 + $0x7c0] sm:$0xff]
    %v332 = vld [vmem:[#allocation2 + $0x7c8] sm:$0xff]
    %v333 = vld [vmem:[#allocation2 + $0x7d0] sm:$0xff]
    %v334 = vld [vmem:[#allocation2 + $0x7d8] sm:$0xff]
    %v335 = vld [vmem:[#allocation2 + $0x7e0] sm:$0xff]
    %v336 = vld [vmem:[#allocation2 + $0x7e8] sm:$0xff]
    %v337 = vld [vmem:[#allocation2 + $0x7f0] sm:$0xff]
    %v338 = vld [vmem:[#allocation2 + $0x7f8] sm:$0xff]
    %v339 = vld [vmem:[#allocation2 + $0x800] sm:$0xff]
    %v340 = vld [vmem:[#allocation2 + $0x808] sm:$0xff]
    %v341 = vld [vmem:[#allocation2 + $0x810] sm:$0xff]
    %v342 = vld [vmem:[#allocation2 + $0x818] sm:$0xff]
    %v343 = vld [vmem:[#allocation2 + $0x820] sm:$0xff]
    %v344 = vld [vmem:[#allocation2 + $0x828] sm:$0xff]
    %v345 = vld [vmem:[#allocation2 + $0x830] sm:$0xff]
    %v346 = vld [vmem:[#allocation2 + $0x838] sm:$0xff]
    %v347 = vld [vmem:[#allocation2 + $0x840] sm:$0xff]
    %v348 = vld [vmem:[#allocation2 + $0x848] sm:$0xff]
    %v349 = vld [vmem:[#allocation2 + $0x850] sm:$0xff]
    %v350 = vld [vmem:[#allocation2 + $0x858] sm:$0xff]
    %v351 = vld [vmem:[#allocation2 + $0x860] sm:$0xff]
    %v352 = vld [vmem:[#allocation2 + $0x868] sm:$0xff]
    %v353 = vld [vmem:[#allocation2 + $0x870] sm:$0xff]
    %v354 = vld [vmem:[#allocation2 + $0x878] sm:$0xff]
    %v355 = vld [vmem:[#allocation2 + $0x880] sm:$0xff]
    %v356 = vld [vmem:[#allocation2 + $0x888] sm:$0xff]
    %v357 = vld [vmem:[#allocation2 + $0x890] sm:$0xff]
    %v358 = vld [vmem:[#allocation2 + $0x898] sm:$0xff]
    %v359 = vld [vmem:[#allocation2 + $0x8a0] sm:$0xff]
    %v360 = vld [vmem:[#allocation2 + $0x8a8] sm:$0xff]
    %v361 = vld [vmem:[#allocation2 + $0x8b0] sm:$0xff]
    %v362 = vld [vmem:[#allocation2 + $0x8b8] sm:$0xff]
    %v363 = vld [vmem:[#allocation2 + $0x8c0] sm:$0xff]
    %v364 = vld [vmem:[#allocation2 + $0x8c8] sm:$0xff]
    %v365 = vld [vmem:[#allocation2 + $0x8d0] sm:$0xff]
    %v366 = vld [vmem:[#allocation2 + $0x8d8] sm:$0xff]
    %v367 = vld [vmem:[#allocation2 + $0x8e0] sm:$0xff]
    %v368 = vld [vmem:[#allocation2 + $0x8e8] sm:$0xff]
    %v369 = vld [vmem:[#allocation2 + $0x8f0] sm:$0xff]
    %v370 = vld [vmem:[#allocation2 + $0x8f8] sm:$0xff]
    %v371 = vld [vmem:[#allocation4] sm:$0x7]
    %v373 = vlaneseq
    %v374 = vshrl.u32 %v373, 7
    %v375 = vsub.s32 0, %v374
    %v376 = vrot.slane %v371, %v375
    %v377 = vlaneseq
    %v378 = vshrl.u32 %v377, 7
    %v379 = vsub.s32 1, %v378
    %v380 = vrot.slane %v371, %v379
    %v381 = vlaneseq
    %v382 = vshrl.u32 %v381, 7
    %v383 = vsub.s32 2, %v382
    %v384 = vrot.slane %v371, %v383
    %388 = vmatprep.subr.mxu0 %v129
    %389 = vmatpush1.msra.mxu0 %v128
    %390 = vmatprep.subr.mxu0 %v126
    %391 = vmatpush1.msra.mxu0 %v125
    %392 = vmatprep.subr.mxu0 %v123
    %393 = vmatpush1.msra.mxu0 %v122
    %394 = vmatprep.subr.mxu0 %v120
    %395 = vmatpush1.msra.mxu0 %v119
    %396 = vmatprep.subr.mxu0 %v117
    %397 = vmatpush1.msra.mxu0 %v116
    %398 = vmatprep.subr.mxu0 %v114
    %399 = vmatpush1.msra.mxu0 %v113
    %400 = vmatprep.subr.mxu0 %v111
    %401 = vmatpush1.msra.mxu0 %v110
    %402 = vmatprep.subr.mxu0 %v108
    %403 = vmatpush1.msra.mxu0 %v107
    %404 = vmatprep.subr.mxu0 %v105
    %405 = vmatpush1.msra.mxu0 %v104
    %406 = vmatprep.subr.mxu0 %v102
    %407 = vmatpush1.msra.mxu0 %v101
    %408 = vmatprep.subr.mxu0 %v99
    %409 = vmatpush1.msra.mxu0 %v98
    %410 = vmatprep.subr.mxu0 %v96
    %411 = vmatpush1.msra.mxu0 %v95
    %412 = vmatprep.subr.mxu0 %v93
    %413 = vmatpush1.msra.mxu0 %v92
    %414 = vmatprep.subr.mxu0 %v90
    %415 = vmatpush1.msra.mxu0 %v89
    %416 = vmatprep.subr.mxu0 %v87
    %417 = vmatpush1.msra.mxu0 %v86
    %418 = vmatprep.subr.mxu0 %v84
    %419 = vmatpush1.msra.mxu0 %v83
    %420 = vmatprep.subr.mxu0 %v177
    %421 = vmatpush2.msra.mxu0 %v176
    %422 = vmatprep.subr.mxu0 %v174
    %423 = vmatpush2.msra.mxu0 %v173
    %424 = vmatprep.subr.mxu0 %v171
    %425 = vmatpush2.msra.mxu0 %v170
    %426 = vmatprep.subr.mxu0 %v168
    %427 = vmatpush2.msra.mxu0 %v167
    %428 = vmatprep.subr.mxu0 %v165
    %429 = vmatpush2.msra.mxu0 %v164
    %430 = vmatprep.subr.mxu0 %v162
    %431 = vmatpush2.msra.mxu0 %v161
    %432 = vmatprep.subr.mxu0 %v159
    %433 = vmatpush2.msra.mxu0 %v158
    %434 = vmatprep.subr.mxu0 %v156
    %435 = vmatpush2.msra.mxu0 %v155
    %436 = vmatprep.subr.mxu0 %v153
    %437 = vmatpush2.msra.mxu0 %v152
    %438 = vmatprep.subr.mxu0 %v150
    %439 = vmatpush2.msra.mxu0 %v149
    %440 = vmatprep.subr.mxu0 %v147
    %441 = vmatpush2.msra.mxu0 %v146
    %442 = vmatprep.subr.mxu0 %v144
    %443 = vmatpush2.msra.mxu0 %v143
    %444 = vmatprep.subr.mxu0 %v141
    %445 = vmatpush2.msra.mxu0 %v140
    %446 = vmatprep.subr.mxu0 %v138
    %447 = vmatpush2.msra.mxu0 %v137
    %448 = vmatprep.subr.mxu0 %v135
    %449 = vmatpush2.msra.mxu0 %v134
    %450 = vmatprep.subr.mxu0 %v132
    %451 = vmatpush2.msra.mxu0 %v131
    %452 = vmatprep.mubr.f32.mxu0 %v72
    %453 = vmatmul.mubr.f32.gmra.mxu0 %v71
    %v454 = vpop.f32.mrf.mxu0
    %v455 = vadd.f32 %v376, %v454
    %v456 = vpop.f32.mrf.mxu0
    %v457 = vadd.f32 %v380, %v456
    %458 = vmatprep.mubr.f32.mxu0 %v78
    %459 = vmatmul.mubr.f32.gmra.mxu0 %v77
    %v460 = vpop.f32.mrf.mxu0
    %v461 = vadd.f32 %v376, %v460
    %v462 = vpop.f32.mrf.mxu0
    %v463 = vadd.f32 %v380, %v462
    %464 = vdwg.mxu0
    %465 = vmatprep.subr.mxu0 %v225
    %466 = vmatpush1.msra.mxu0 %v224
    %467 = vmatprep.subr.mxu0 %v222
    %468 = vmatpush1.msra.mxu0 %v221
    %469 = vmatprep.subr.mxu0 %v219
    %470 = vmatpush1.msra.mxu0 %v218
    %471 = vmatprep.subr.mxu0 %v216
    %472 = vmatpush1.msra.mxu0 %v215
    %473 = vmatprep.subr.mxu0 %v213
    %474 = vmatpush1.msra.mxu0 %v212
    %475 = vmatprep.subr.mxu0 %v210
    %476 = vmatpush1.msra.mxu0 %v209
    %477 = vmatprep.subr.mxu0 %v207
    %478 = vmatpush1.msra.mxu0 %v206
    %479 = vmatprep.subr.mxu0 %v204
    %480 = vmatpush1.msra.mxu0 %v203
    %481 = vmatprep.subr.mxu0 %v201
    %482 = vmatpush1.msra.mxu0 %v200
    %483 = vmatprep.subr.mxu0 %v198
    %484 = vmatpush1.msra.mxu0 %v197
    %485 = vmatprep.subr.mxu0 %v195
    %486 = vmatpush1.msra.mxu0 %v194
    %487 = vmatprep.subr.mxu0 %v192
    %488 = vmatpush1.msra.mxu0 %v191
    %489 = vmatprep.subr.mxu0 %v189
    %490 = vmatpush1.msra.mxu0 %v188
    %491 = vmatprep.subr.mxu0 %v186
    %492 = vmatpush1.msra.mxu0 %v185
    %493 = vmatprep.subr.mxu0 %v183
    %494 = vmatpush1.msra.mxu0 %v182
    %495 = vmatprep.subr.mxu0 %v180
    %496 = vmatpush1.msra.mxu0 %v179
    %497 = vmatprep.subr.mxu0 %v273
    %498 = vmatpush2.msra.mxu0 %v272
    %499 = vmatprep.subr.mxu0 %v270
    %500 = vmatpush2.msra.mxu0 %v269
    %501 = vmatprep.subr.mxu0 %v267
    %502 = vmatpush2.msra.mxu0 %v266
    %503 = vmatprep.subr.mxu0 %v264
    %504 = vmatpush2.msra.mxu0 %v263
    %505 = vmatprep.subr.mxu0 %v261
    %506 = vmatpush2.msra.mxu0 %v260
    %507 = vmatprep.subr.mxu0 %v258
    %508 = vmatpush2.msra.mxu0 %v257
    %509 = vmatprep.subr.mxu0 %v255
    %510 = vmatpush2.msra.mxu0 %v254
    %511 = vmatprep.subr.mxu0 %v252
    %512 = vmatpush2.msra.mxu0 %v251
    %513 = vmatprep.subr.mxu0 %v249
    %514 = vmatpush2.msra.mxu0 %v248
    %515 = vmatprep.subr.mxu0 %v246
    %516 = vmatpush2.msra.mxu0 %v245
    %517 = vmatprep.subr.mxu0 %v243
    %518 = vmatpush2.msra.mxu0 %v242
    %519 = vmatprep.subr.mxu0 %v240
    %520 = vmatpush2.msra.mxu0 %v239
    %521 = vmatprep.subr.mxu0 %v237
    %522 = vmatpush2.msra.mxu0 %v236
    %523 = vmatprep.subr.mxu0 %v234
    %524 = vmatpush2.msra.mxu0 %v233
    %525 = vmatprep.subr.mxu0 %v231
    %526 = vmatpush2.msra.mxu0 %v230
    %527 = vmatprep.subr.mxu0 %v228
    %528 = vmatpush2.msra.mxu0 %v227
    %529 = vmatprep.mubr.f32.mxu0 %v74
    %530 = vmatmul.mubr.f32.gmra.mxu0 %v73
    %v531 = vpop.f32.mrf.mxu0
    %v532 = vadd.f32 %v455, %v531
    %v533 = vpop.f32.mrf.mxu0
    %v534 = vadd.f32 %v457, %v533
    %535 = vmatprep.mubr.f32.mxu0 %v80
    %536 = vmatmul.mubr.f32.gmra.mxu0 %v79
    %v537 = vpop.f32.mrf.mxu0
    %v538 = vadd.f32 %v461, %v537
    %v539 = vpop.f32.mrf.mxu0
    %v540 = vadd.f32 %v463, %v539
    %541 = vdwg.mxu0
    %542 = vmatprep.subr.mxu0 %v321
    %543 = vmatpush1.msra.mxu0 %v320
    %544 = vmatprep.subr.mxu0 %v318
    %545 = vmatpush1.msra.mxu0 %v317
    %546 = vmatprep.subr.mxu0 %v315
    %547 = vmatpush1.msra.mxu0 %v314
    %548 = vmatprep.subr.mxu0 %v312
    %549 = vmatpush1.msra.mxu0 %v311
    %550 = vmatprep.subr.mxu0 %v309
    %551 = vmatpush1.msra.mxu0 %v308
    %552 = vmatprep.subr.mxu0 %v306
    %553 = vmatpush1.msra.mxu0 %v305
    %554 = vmatprep.subr.mxu0 %v303
    %555 = vmatpush1.msra.mxu0 %v302
    %556 = vmatprep.subr.mxu0 %v300
    %557 = vmatpush1.msra.mxu0 %v299
    %558 = vmatprep.subr.mxu0 %v297
    %559 = vmatpush1.msra.mxu0 %v296
    %560 = vmatprep.subr.mxu0 %v294
    %561 = vmatpush1.msra.mxu0 %v293
    %562 = vmatprep.subr.mxu0 %v291
    %563 = vmatpush1.msra.mxu0 %v290
    %564 = vmatprep.subr.mxu0 %v288
    %565 = vmatpush1.msra.mxu0 %v287
    %566 = vmatprep.subr.mxu0 %v285
    %567 = vmatpush1.msra.mxu0 %v284
    %568 = vmatprep.subr.mxu0 %v282
    %569 = vmatpush1.msra.mxu0 %v281
    %570 = vmatprep.subr.mxu0 %v279
    %571 = vmatpush1.msra.mxu0 %v278
    %572 = vmatprep.subr.mxu0 %v276
    %573 = vmatpush1.msra.mxu0 %v275
    %574 = vmatprep.subr.mxu0 %v369
    %575 = vmatpush2.msra.mxu0 %v368
    %576 = vmatprep.subr.mxu0 %v366
    %577 = vmatpush2.msra.mxu0 %v365
    %578 = vmatprep.subr.mxu0 %v363
    %579 = vmatpush2.msra.mxu0 %v362
    %580 = vmatprep.subr.mxu0 %v360
    %581 = vmatpush2.msra.mxu0 %v359
    %582 = vmatprep.subr.mxu0 %v357
    %583 = vmatpush2.msra.mxu0 %v356
    %584 = vmatprep.subr.mxu0 %v354
    %585 = vmatpush2.msra.mxu0 %v353
    %586 = vmatprep.subr.mxu0 %v351
    %587 = vmatpush2.msra.mxu0 %v350
    %588 = vmatprep.subr.mxu0 %v348
    %589 = vmatpush2.msra.mxu0 %v347
    %590 = vmatprep.subr.mxu0 %v345
    %591 = vmatpush2.msra.mxu0 %v344
    %592 = vmatprep.subr.mxu0 %v342
    %593 = vmatpush2.msra.mxu0 %v341
    %594 = vmatprep.subr.mxu0 %v339
    %595 = vmatpush2.msra.mxu0 %v338
    %596 = vmatprep.subr.mxu0 %v336
    %597 = vmatpush2.msra.mxu0 %v335
    %598 = vmatprep.subr.mxu0 %v333
    %599 = vmatpush2.msra.mxu0 %v332
    %600 = vmatprep.subr.mxu0 %v330
    %601 = vmatpush2.msra.mxu0 %v329
    %602 = vmatprep.subr.mxu0 %v327
    %603 = vmatpush2.msra.mxu0 %v326
    %604 = vmatprep.subr.mxu0 %v324
    %605 = vmatpush2.msra.mxu0 %v323
    %606 = vmatprep.mubr.f32.mxu0 %v76
    %607 = vmatmul.mubr.f32.gmra.mxu0 %v75
    %v608 = vpop.f32.mrf.mxu0
    %v609 = vadd.f32 %v532, %v608
    %v610 = vpop.f32.mrf.mxu0
    %v611 = vadd.f32 %v534, %v610
    %612 = vmatprep.mubr.f32.mxu0 %v82
    %613 = vmatmul.mubr.f32.gmra.mxu0 %v81
    %v614 = vpop.f32.mrf.mxu0
    %v615 = vadd.f32 %v538, %v614
    %v616 = vpop.f32.mrf.mxu0
    %v617 = vadd.f32 %v540, %v616
    %618 = vdwg.mxu0
    %619 = vmatprep.subr.mxu0 0.0
    %620 = vmatpush1.msra.mxu0 %v130
    %621 = vmatprep.subr.mxu0 0.0
    %622 = vmatpush1.msra.mxu0 %v127
    %623 = vmatprep.subr.mxu0 0.0
    %624 = vmatpush1.msra.mxu0 %v124
    %625 = vmatprep.subr.mxu0 0.0
    %626 = vmatpush1.msra.mxu0 %v121
    %627 = vmatprep.subr.mxu0 0.0
    %628 = vmatpush1.msra.mxu0 %v118
    %629 = vmatprep.subr.mxu0 0.0
    %630 = vmatpush1.msra.mxu0 %v115
    %631 = vmatprep.subr.mxu0 0.0
    %632 = vmatpush1.msra.mxu0 %v112
    %633 = vmatprep.subr.mxu0 0.0
    %634 = vmatpush1.msra.mxu0 %v109
    %635 = vmatprep.subr.mxu0 0.0
    %636 = vmatpush1.msra.mxu0 %v106
    %637 = vmatprep.subr.mxu0 0.0
    %638 = vmatpush1.msra.mxu0 %v103
    %639 = vmatprep.subr.mxu0 0.0
    %640 = vmatpush1.msra.mxu0 %v100
    %641 = vmatprep.subr.mxu0 0.0
    %642 = vmatpush1.msra.mxu0 %v97
    %643 = vmatprep.subr.mxu0 0.0
    %644 = vmatpush1.msra.mxu0 %v94
    %645 = vmatprep.subr.mxu0 0.0
    %646 = vmatpush1.msra.mxu0 %v91
    %647 = vmatprep.subr.mxu0 0.0
    %648 = vmatpush1.msra.mxu0 %v88
    %649 = vmatprep.subr.mxu0 0.0
    %650 = vmatpush1.msra.mxu0 %v85
    %651 = vmatprep.subr.mxu0 0.0
    %652 = vmatpush2.msra.mxu0 %v178
    %653 = vmatprep.subr.mxu0 0.0
    %654 = vmatpush2.msra.mxu0 %v175
    %655 = vmatprep.subr.mxu0 0.0
    %656 = vmatpush2.msra.mxu0 %v172
    %657 = vmatprep.subr.mxu0 0.0
    %658 = vmatpush2.msra.mxu0 %v169
    %659 = vmatprep.subr.mxu0 0.0
    %660 = vmatpush2.msra.mxu0 %v166
    %661 = vmatprep.subr.mxu0 0.0
    %662 = vmatpush2.msra.mxu0 %v163
    %663 = vmatprep.subr.mxu0 0.0
    %664 = vmatpush2.msra.mxu0 %v160
    %665 = vmatprep.subr.mxu0 0.0
    %666 = vmatpush2.msra.mxu0 %v157
    %667 = vmatprep.subr.mxu0 0.0
    %668 = vmatpush2.msra.mxu0 %v154
    %669 = vmatprep.subr.mxu0 0.0
    %670 = vmatpush2.msra.mxu0 %v151
    %671 = vmatprep.subr.mxu0 0.0
    %672 = vmatpush2.msra.mxu0 %v148
    %673 = vmatprep.subr.mxu0 0.0
    %674 = vmatpush2.msra.mxu0 %v145
    %675 = vmatprep.subr.mxu0 0.0
    %676 = vmatpush2.msra.mxu0 %v142
    %677 = vmatprep.subr.mxu0 0.0
    %678 = vmatpush2.msra.mxu0 %v139
    %679 = vmatprep.subr.mxu0 0.0
    %680 = vmatpush2.msra.mxu0 %v136
    %681 = vmatprep.subr.mxu0 0.0
    %682 = vmatpush2.msra.mxu0 %v133
    %683 = vmatprep.mubr.f32.mxu0 %v72
    %684 = vmatmul.mubr.f32.gmra.mxu0 %v71
    %v685 = vpop.f32.mrf.mxu0
    %v686 = vadd.f32 %v384, %v685
    %v687 = vpop.f32.mrf.mxu0
    %688 = vmatprep.mubr.f32.mxu0 %v78
    %689 = vmatmul.mubr.f32.gmra.mxu0 %v77
    %v690 = vpop.f32.mrf.mxu0
    %v691 = vadd.f32 %v384, %v690
    %v692 = vpop.f32.mrf.mxu0
    %693 = vdwg.mxu0
    %694 = vmatprep.subr.mxu0 0.0
    %695 = vmatpush1.msra.mxu0 %v226
    %696 = vmatprep.subr.mxu0 0.0
    %697 = vmatpush1.msra.mxu0 %v223
    %698 = vmatprep.subr.mxu0 0.0
    %699 = vmatpush1.msra.mxu0 %v220
    %700 = vmatprep.subr.mxu0 0.0
    %701 = vmatpush1.msra.mxu0 %v217
    %702 = vmatprep.subr.mxu0 0.0
    %703 = vmatpush1.msra.mxu0 %v214
    %704 = vmatprep.subr.mxu0 0.0
    %705 = vmatpush1.msra.mxu0 %v211
    %706 = vmatprep.subr.mxu0 0.0
    %707 = vmatpush1.msra.mxu0 %v208
    %708 = vmatprep.subr.mxu0 0.0
    %709 = vmatpush1.msra.mxu0 %v205
    %710 = vmatprep.subr.mxu0 0.0
    %711 = vmatpush1.msra.mxu0 %v202
    %712 = vmatprep.subr.mxu0 0.0
    %713 = vmatpush1.msra.mxu0 %v199
    %714 = vmatprep.subr.mxu0 0.0
    %715 = vmatpush1.msra.mxu0 %v196
    %716 = vmatprep.subr.mxu0 0.0
    %717 = vmatpush1.msra.mxu0 %v193
    %718 = vmatprep.subr.mxu0 0.0
    %719 = vmatpush1.msra.mxu0 %v190
    %720 = vmatprep.subr.mxu0 0.0
    %721 = vmatpush1.msra.mxu0 %v187
    %722 = vmatprep.subr.mxu0 0.0
    %723 = vmatpush1.msra.mxu0 %v184
    %724 = vmatprep.subr.mxu0 0.0
    %725 = vmatpush1.msra.mxu0 %v181
    %726 = vmatprep.subr.mxu0 0.0
    %727 = vmatpush2.msra.mxu0 %v274
    %728 = vmatprep.subr.mxu0 0.0
    %729 = vmatpush2.msra.mxu0 %v271
    %730 = vmatprep.subr.mxu0 0.0
    %731 = vmatpush2.msra.mxu0 %v268
    %732 = vmatprep.subr.mxu0 0.0
    %733 = vmatpush2.msra.mxu0 %v265
    %734 = vmatprep.subr.mxu0 0.0
    %735 = vmatpush2.msra.mxu0 %v262
    %736 = vmatprep.subr.mxu0 0.0
    %737 = vmatpush2.msra.mxu0 %v259
    %738 = vmatprep.subr.mxu0 0.0
    %739 = vmatpush2.msra.mxu0 %v256
    %740 = vmatprep.subr.mxu0 0.0
    %741 = vmatpush2.msra.mxu0 %v253
    %742 = vmatprep.subr.mxu0 0.0
    %743 = vmatpush2.msra.mxu0 %v250
    %744 = vmatprep.subr.mxu0 0.0
    %745 = vmatpush2.msra.mxu0 %v247
    %746 = vmatprep.subr.mxu0 0.0
    %747 = vmatpush2.msra.mxu0 %v244
    %748 = vmatprep.subr.mxu0 0.0
    %749 = vmatpush2.msra.mxu0 %v241
    %750 = vmatprep.subr.mxu0 0.0
    %751 = vmatpush2.msra.mxu0 %v238
    %752 = vmatprep.subr.mxu0 0.0
    %753 = vmatpush2.msra.mxu0 %v235
    %754 = vmatprep.subr.mxu0 0.0
    %755 = vmatpush2.msra.mxu0 %v232
    %756 = vmatprep.subr.mxu0 0.0
    %757 = vmatpush2.msra.mxu0 %v229
    %758 = vmatprep.mubr.f32.mxu0 %v74
    %759 = vmatmul.mubr.f32.gmra.mxu0 %v73
    %v760 = vpop.f32.mrf.mxu0
    %v761 = vadd.f32 %v686, %v760
    %v762 = vpop.f32.mrf.mxu0
    %763 = vmatprep.mubr.f32.mxu0 %v80
    %764 = vmatmul.mubr.f32.gmra.mxu0 %v79
    %v765 = vpop.f32.mrf.mxu0
    %v766 = vadd.f32 %v691, %v765
    %v767 = vpop.f32.mrf.mxu0
    %768 = vdwg.mxu0
    %769 = vmatprep.subr.mxu0 0.0
    %770 = vmatpush1.msra.mxu0 %v322
    %771 = vmatprep.subr.mxu0 0.0
    %772 = vmatpush1.msra.mxu0 %v319
    %773 = vmatprep.subr.mxu0 0.0
    %774 = vmatpush1.msra.mxu0 %v316
    %775 = vmatprep.subr.mxu0 0.0
    %776 = vmatpush1.msra.mxu0 %v313
    %777 = vmatprep.subr.mxu0 0.0
    %778 = vmatpush1.msra.mxu0 %v310
    %779 = vmatprep.subr.mxu0 0.0
    %780 = vmatpush1.msra.mxu0 %v307
    %781 = vmatprep.subr.mxu0 0.0
    %782 = vmatpush1.msra.mxu0 %v304
    %783 = vmatprep.subr.mxu0 0.0
    %784 = vmatpush1.msra.mxu0 %v301
    %785 = vmatprep.subr.mxu0 0.0
    %786 = vmatpush1.msra.mxu0 %v298
    %787 = vmatprep.subr.mxu0 0.0
    %788 = vmatpush1.msra.mxu0 %v295
    %789 = vmatprep.subr.mxu0 0.0
    %790 = vmatpush1.msra.mxu0 %v292
    %791 = vmatprep.subr.mxu0 0.0
    %792 = vmatpush1.msra.mxu0 %v289
    %793 = vmatprep.subr.mxu0 0.0
    %794 = vmatpush1.msra.mxu0 %v286
    %795 = vmatprep.subr.mxu0 0.0
    %796 = vmatpush1.msra.mxu0 %v283
    %797 = vmatprep.subr.mxu0 0.0
    %798 = vmatpush1.msra.mxu0 %v280
    %799 = vmatprep.subr.mxu0 0.0
    %800 = vmatpush1.msra.mxu0 %v277
    %801 = vmatprep.subr.mxu0 0.0
    %802 = vmatpush2.msra.mxu0 %v370
    %803 = vmatprep.subr.mxu0 0.0
    %804 = vmatpush2.msra.mxu0 %v367
    %805 = vmatprep.subr.mxu0 0.0
    %806 = vmatpush2.msra.mxu0 %v364
    %807 = vmatprep.subr.mxu0 0.0
    %808 = vmatpush2.msra.mxu0 %v361
    %809 = vmatprep.subr.mxu0 0.0
    %810 = vmatpush2.msra.mxu0 %v358
    %811 = vmatprep.subr.mxu0 0.0
    %812 = vmatpush2.msra.mxu0 %v355
    %813 = vmatprep.subr.mxu0 0.0
    %814 = vmatpush2.msra.mxu0 %v352
    %815 = vmatprep.subr.mxu0 0.0
    %816 = vmatpush2.msra.mxu0 %v349
    %817 = vmatprep.subr.mxu0 0.0
    %818 = vmatpush2.msra.mxu0 %v346
    %819 = vmatprep.subr.mxu0 0.0
    %820 = vmatpush2.msra.mxu0 %v343
    %821 = vmatprep.subr.mxu0 0.0
    %822 = vmatpush2.msra.mxu0 %v340
    %823 = vmatprep.subr.mxu0 0.0
    %824 = vmatpush2.msra.mxu0 %v337
    %825 = vmatprep.subr.mxu0 0.0
    %826 = vmatpush2.msra.mxu0 %v334
    %827 = vmatprep.subr.mxu0 0.0
    %828 = vmatpush2.msra.mxu0 %v331
    %829 = vmatprep.subr.mxu0 0.0
    %830 = vmatpush2.msra.mxu0 %v328
    %831 = vmatprep.subr.mxu0 0.0
    %832 = vmatpush2.msra.mxu0 %v325
    %833 = vmatprep.mubr.f32.mxu0 %v76
    %834 = vmatmul.mubr.f32.gmra.mxu0 %v75
    %v835 = vpop.f32.mrf.mxu0
    %v836 = vadd.f32 %v761, %v835
    %v837 = vpop.f32.mrf.mxu0
    %838 = vmatprep.mubr.f32.mxu0 %v82
    %839 = vmatmul.mubr.f32.gmra.mxu0 %v81
    %v840 = vpop.f32.mrf.mxu0
    %v841 = vadd.f32 %v766, %v840
    %v842 = vpop.f32.mrf.mxu0
    %843 = vdwg.mxu0
    %v844 = vmul.f32 %v609, 0.1
    %v845 = vmul.f32 %v611, 0.1
    %v846 = vmul.f32 %v836, 0.1
    %v847 = vmul.f32 %v615, 0.1
    %v848 = vmul.f32 %v617, 0.1
    %v849 = vmul.f32 %v841, 0.1
    %v850 = vmax.f32 %v609, %v844
    %v851 = vmax.f32 %v611, %v845
    %v852 = vmax.f32 %v836, %v846
    %v853 = vmax.f32 %v615, %v847
    %v854 = vmax.f32 %v617, %v848
    %v855 = vmax.f32 %v841, %v849
    %v856 = vld [vmem:[#allocation6] sm:$0xff]
    %v857 = vld [vmem:[#allocation6 + $0x8] sm:$0xff]
    %v858 = vld [vmem:[#allocation6 + $0x10] sm:$0xff]
    %v859 = vld [vmem:[#allocation6 + $0x18] sm:$0xff]
    %v860 = vld [vmem:[#allocation6 + $0x20] sm:$0xff]
    %v861 = vld [vmem:[#allocation6 + $0x28] sm:$0xff]
    %v862 = vld [vmem:[#allocation6 + $0x30] sm:$0xff]
    %v863 = vld [vmem:[#allocation6 + $0x38] sm:$0xff]
    %v864 = vld [vmem:[#allocation6 + $0x40] sm:$0xff]
    %v865 = vld [vmem:[#allocation6 + $0x48] sm:$0xff]
    %v866 = vld [vmem:[#allocation6 + $0x50] sm:$0xff]
    %v867 = vld [vmem:[#allocation6 + $0x58] sm:$0xff]
    %v868 = vld [vmem:[#allocation6 + $0x60] sm:$0xff]
    %v869 = vld [vmem:[#allocation6 + $0x68] sm:$0xff]
    %v870 = vld [vmem:[#allocation6 + $0x70] sm:$0xff]
    %v871 = vld [vmem:[#allocation6 + $0x78] sm:$0xff]
    %v872 = vld [vmem:[#allocation6 + $0x80] sm:$0xff]
    %v873 = vld [vmem:[#allocation6 + $0x88] sm:$0xff]
    %v874 = vld [vmem:[#allocation6 + $0x90] sm:$0xff]
    %v875 = vld [vmem:[#allocation6 + $0x98] sm:$0xff]
    %v876 = vld [vmem:[#allocation6 + $0xa0] sm:$0xff]
    %v877 = vld [vmem:[#allocation6 + $0xa8] sm:$0xff]
    %v878 = vld [vmem:[#allocation6 + $0xb0] sm:$0xff]
    %v879 = vld [vmem:[#allocation6 + $0xb8] sm:$0xff]
    %v880 = vld [vmem:[#allocation6 + $0xc0] sm:$0xff]
    %v881 = vld [vmem:[#allocation6 + $0xc8] sm:$0xff]
    %v882 = vld [vmem:[#allocation6 + $0xd0] sm:$0xff]
    %v883 = vld [vmem:[#allocation6 + $0xd8] sm:$0xff]
    %v884 = vld [vmem:[#allocation6 + $0xe0] sm:$0xff]
    %v885 = vld [vmem:[#allocation6 + $0xe8] sm:$0xff]
    %v886 = vld [vmem:[#allocation6 + $0xf0] sm:$0xff]
    %v887 = vld [vmem:[#allocation6 + $0xf8] sm:$0xff]
    %v888 = vld [vmem:[#allocation6 + $0x100] sm:$0xff]
    %v889 = vld [vmem:[#allocation6 + $0x108] sm:$0xff]
    %v890 = vld [vmem:[#allocation6 + $0x110] sm:$0xff]
    %v891 = vld [vmem:[#allocation6 + $0x118] sm:$0xff]
    %v892 = vld [vmem:[#allocation6 + $0x120] sm:$0xff]
    %v893 = vld [vmem:[#allocation6 + $0x128] sm:$0xff]
    %v894 = vld [vmem:[#allocation6 + $0x130] sm:$0xff]
    %v895 = vld [vmem:[#allocation6 + $0x138] sm:$0xff]
    %v896 = vld [vmem:[#allocation6 + $0x140] sm:$0xff]
    %v897 = vld [vmem:[#allocation6 + $0x148] sm:$0xff]
    %v898 = vld [vmem:[#allocation6 + $0x150] sm:$0xff]
    %v899 = vld [vmem:[#allocation6 + $0x158] sm:$0xff]
    %v900 = vld [vmem:[#allocation6 + $0x160] sm:$0xff]
    %v901 = vld [vmem:[#allocation6 + $0x168] sm:$0xff]
    %v902 = vld [vmem:[#allocation6 + $0x170] sm:$0xff]
    %v903 = vld [vmem:[#allocation6 + $0x178] sm:$0xff]
    %v904 = vld [vmem:[#allocation7] sm:$0x1]
    %v906 = vlaneseq
    %v907 = vshrl.u32 %v906, 7
    %v908 = vsub.s32 0, %v907
    %v909 = vrot.slane %v904, %v908
    %911 = vmatprep.subr.mxu0 0.0
    %912 = vmatpush1.msra.mxu0 %v871
    %913 = vmatprep.subr.mxu0 0.0
    %914 = vmatpush1.msra.mxu0 %v870
    %915 = vmatprep.subr.mxu0 0.0
    %916 = vmatpush1.msra.mxu0 %v869
    %917 = vmatprep.subr.mxu0 0.0
    %918 = vmatpush1.msra.mxu0 %v868
    %919 = vmatprep.subr.mxu0 0.0
    %920 = vmatpush1.msra.mxu0 %v867
    %921 = vmatprep.subr.mxu0 0.0
    %922 = vmatpush1.msra.mxu0 %v866
    %923 = vmatprep.subr.mxu0 0.0
    %924 = vmatpush1.msra.mxu0 %v865
    %925 = vmatprep.subr.mxu0 0.0
    %926 = vmatpush1.msra.mxu0 %v864
    %927 = vmatprep.subr.mxu0 0.0
    %928 = vmatpush1.msra.mxu0 %v863
    %929 = vmatprep.subr.mxu0 0.0
    %930 = vmatpush1.msra.mxu0 %v862
    %931 = vmatprep.subr.mxu0 0.0
    %932 = vmatpush1.msra.mxu0 %v861
    %933 = vmatprep.subr.mxu0 0.0
    %934 = vmatpush1.msra.mxu0 %v860
    %935 = vmatprep.subr.mxu0 0.0
    %936 = vmatpush1.msra.mxu0 %v859
    %937 = vmatprep.subr.mxu0 0.0
    %938 = vmatpush1.msra.mxu0 %v858
    %939 = vmatprep.subr.mxu0 0.0
    %940 = vmatpush1.msra.mxu0 %v857
    %941 = vmatprep.subr.mxu0 0.0
    %942 = vmatpush1.msra.mxu0 %v856
    %943 = vmatprep.subr.mxu0 0.0
    %944 = vmatpush2.msra.mxu0 %v887
    %945 = vmatprep.subr.mxu0 0.0
    %946 = vmatpush2.msra.mxu0 %v886
    %947 = vmatprep.subr.mxu0 0.0
    %948 = vmatpush2.msra.mxu0 %v885
    %949 = vmatprep.subr.mxu0 0.0
    %950 = vmatpush2.msra.mxu0 %v884
    %951 = vmatprep.subr.mxu0 0.0
    %952 = vmatpush2.msra.mxu0 %v883
    %953 = vmatprep.subr.mxu0 0.0
    %954 = vmatpush2.msra.mxu0 %v882
    %955 = vmatprep.subr.mxu0 0.0
    %956 = vmatpush2.msra.mxu0 %v881
    %957 = vmatprep.subr.mxu0 0.0
    %958 = vmatpush2.msra.mxu0 %v880
    %959 = vmatprep.subr.mxu0 0.0
    %960 = vmatpush2.msra.mxu0 %v879
    %961 = vmatprep.subr.mxu0 0.0
    %962 = vmatpush2.msra.mxu0 %v878
    %963 = vmatprep.subr.mxu0 0.0
    %964 = vmatpush2.msra.mxu0 %v877
    %965 = vmatprep.subr.mxu0 0.0
    %966 = vmatpush2.msra.mxu0 %v876
    %967 = vmatprep.subr.mxu0 0.0
    %968 = vmatpush2.msra.mxu0 %v875
    %969 = vmatprep.subr.mxu0 0.0
    %970 = vmatpush2.msra.mxu0 %v874
    %971 = vmatprep.subr.mxu0 0.0
    %972 = vmatpush2.msra.mxu0 %v873
    %973 = vmatprep.subr.mxu0 0.0
    %974 = vmatpush2.msra.mxu0 %v872
    %975 = vmatprep.mubr.f32.mxu0 %v851
    %976 = vmatmul.mubr.f32.gmra.mxu0 %v850
    %v977 = vpop.f32.mrf.mxu0
    %v978 = vadd.f32 %v909, %v977
    %v979 = vpop.f32.mrf.mxu0
    %980 = vmatprep.mubr.f32.mxu0 %v854
    %981 = vmatmul.mubr.f32.gmra.mxu0 %v853
    %v982 = vpop.f32.mrf.mxu0
    %v983 = vadd.f32 %v909, %v982
    %v984 = vpop.f32.mrf.mxu0
    %985 = vdwg.mxu0
    %986 = vmatprep.subr.mxu0 0.0
    %987 = vmatpush1.msra.mxu0 %v903
    %988 = vmatprep.subr.mxu0 0.0
    %989 = vmatpush1.msra.mxu0 %v902
    %990 = vmatprep.subr.mxu0 0.0
    %991 = vmatpush1.msra.mxu0 %v901
    %992 = vmatprep.subr.mxu0 0.0
    %993 = vmatpush1.msra.mxu0 %v900
    %994 = vmatprep.subr.mxu0 0.0
    %995 = vmatpush1.msra.mxu0 %v899
    %996 = vmatprep.subr.mxu0 0.0
    %997 = vmatpush1.msra.mxu0 %v898
    %998 = vmatprep.subr.mxu0 0.0
    %999 = vmatpush1.msra.mxu0 %v897
    %1000 = vmatprep.subr.mxu0 0.0
    %1001 = vmatpush1.msra.mxu0 %v896
    %1002 = vmatprep.subr.mxu0 0.0
    %1003 = vmatpush1.msra.mxu0 %v895
    %1004 = vmatprep.subr.mxu0 0.0
    %1005 = vmatpush1.msra.mxu0 %v894
    %1006 = vmatprep.subr.mxu0 0.0
    %1007 = vmatpush1.msra.mxu0 %v893
    %1008 = vmatprep.subr.mxu0 0.0
    %1009 = vmatpush1.msra.mxu0 %v892
    %1010 = vmatprep.subr.mxu0 0.0
    %1011 = vmatpush1.msra.mxu0 %v891
    %1012 = vmatprep.subr.mxu0 0.0
    %1013 = vmatpush1.msra.mxu0 %v890
    %1014 = vmatprep.subr.mxu0 0.0
    %1015 = vmatpush1.msra.mxu0 %v889
    %1016 = vmatprep.subr.mxu0 0.0
    %1017 = vmatpush1.msra.mxu0 %v888
    %1018 = vmatprep.subr.mxu0 0.0
    %1019 = vmatpush2.msra.mxu0 0.0
    %1020 = vmatprep.subr.mxu0 0.0
    %1021 = vmatpush2.msra.mxu0 0.0
    %1022 = vmatprep.subr.mxu0 0.0
    %1023 = vmatpush2.msra.mxu0 0.0
    %1024 = vmatprep.subr.mxu0 0.0
    %1025 = vmatpush2.msra.mxu0 0.0
    %1026 = vmatprep.subr.mxu0 0.0
    %1027 = vmatpush2.msra.mxu0 0.0
    %1028 = vmatprep.subr.mxu0 0.0
    %1029 = vmatpush2.msra.mxu0 0.0
    %1030 = vmatprep.subr.mxu0 0.0
    %1031 = vmatpush2.msra.mxu0 0.0
    %1032 = vmatprep.subr.mxu0 0.0
    %1033 = vmatpush2.msra.mxu0 0.0
    %1034 = vmatprep.subr.mxu0 0.0
    %1035 = vmatpush2.msra.mxu0 0.0
    %1036 = vmatprep.subr.mxu0 0.0
    %1037 = vmatpush2.msra.mxu0 0.0
    %1038 = vmatprep.subr.mxu0 0.0
    %1039 = vmatpush2.msra.mxu0 0.0
    %1040 = vmatprep.subr.mxu0 0.0
    %1041 = vmatpush2.msra.mxu0 0.0
    %1042 = vmatprep.subr.mxu0 0.0
    %1043 = vmatpush2.msra.mxu0 0.0
    %1044 = vmatprep.subr.mxu0 0.0
    %1045 = vmatpush2.msra.mxu0 0.0
    %1046 = vmatprep.subr.mxu0 0.0
    %1047 = vmatpush2.msra.mxu0 0.0
    %1048 = vmatprep.subr.mxu0 0.0
    %1049 = vmatpush2.msra.mxu0 0.0
    %1050 = vmatprep.mubr.f32.mxu0 0.0
    %1051 = vmatmul.mubr.f32.gmra.mxu0 %v852
    %v1052 = vpop.f32.mrf.mxu0
    %v1053 = vadd.f32 %v978, %v1052
    %v1054 = vpop.f32.mrf.mxu0
    %1055 = vmatprep.mubr.f32.mxu0 0.0
    %1056 = vmatmul.mubr.f32.gmra.mxu0 %v855
    %v1057 = vpop.f32.mrf.mxu0
    %v1058 = vadd.f32 %v983, %v1057
    %v1059 = vpop.f32.mrf.mxu0
    %1060 = vdwg.mxu0
    %1061 = vst [vmem:[%s5] sm:$0xff] %v1053
    %1062 = vst [vmem:[%s5 + $0x8] sm:$0xff] %v1058
    // Predicated region
    $region38: #{sector_forward.1} parent=1 // pred_check
      _
    $region39: #{sector_forward.1} parent=1 // pred_check_branch
      %1064 = sbr.rel (0) target = $region41
    $region40: #{sector_forward.1} parent=1 // pred_region
      _
    $region41: #{sector_forward.1} parent=1 // pred_fallthru
      _
    // Predicated region
    $region42: #{sector_forward.1} parent=1 // pred_check
      _
    $region43: #{sector_forward.1} parent=1 // pred_check_branch
      %1066 = sbr.rel (0) target = $region45
    $region44: #{sector_forward.1} parent=1 // pred_region
      _
    $region45: #{sector_forward.1} parent=1 // pred_fallthru
      _
    %1067 = vsyncpa [#allocation3], 1
    %1068 = vsyncpa [#allocation5], 1
    %1069 = vsyncpa [#allocation8], 1

</llo_original>
